<compile_context>
chip_gen: v7x
topology: tpu7x:2x2x1
jax: 0.10.0
libtpu: 0.0.40
codegen_flags: <defaults>
</compile_context>

<pallas_src>
import functools

import jax
import jax.numpy as jnp
from jax.experimental import pallas as pl
from jax.experimental.pallas import tpu as pltpu


def _round_up(a, b):
    return (a + b - 1) // b * b


# ----------------------------------------------------------------------------
# Pallas kernel: the whole MLP fused (all layers + activations in one body)
# ----------------------------------------------------------------------------
def _fused_mlp_kernel(*refs, num_layers, sigmoid_output, compute_dtype):
    # refs = (x_ref, w0, b0, w1, b1, ..., w_{L-1}, b_{L-1}, o_ref)
    x_ref = refs[0]
    o_ref = refs[-1]
    wb = refs[1:-1]

    h = x_ref[...].astype(compute_dtype)              # bf16 LHS for the MXU
    for i in range(num_layers):                       # static unroll
        w = wb[2 * i][...]                            # (K_i, N_i), compute dtype
        b = wb[2 * i + 1][...]                        # (1,  N_i), f32
        # MXU matmul with f32 accumulation; bias add in f32 on the VPU.
        h = jnp.dot(h, w, preferred_element_type=jnp.float32) + b
        if i < num_layers - 1:
            # ReLU in f32 (v5e has no bf16 VALU); store the result in bf16 to
            # halve inter-layer traffic and feed the next bf16 matmul directly.
            h = jnp.maximum(h, 0.0).astype(compute_dtype)
    if sigmoid_output:
        h = jax.nn.sigmoid(h)                         # EUP exp, f32 epilogue
    o_ref[...] = h.astype(o_ref.dtype)


def _const_spec(shape, single_buffer):
    """BlockSpec for a weight/bias that is fully resident (constant index_map)."""
    idx = lambda i: tuple(0 for _ in shape)
    if single_buffer and hasattr(pl, "Buffered"):
        try:
            # Constant index_map => the pipeline never refetches this block, so
            # one VMEM buffer is enough (halves resident weight footprint).
            return pl.BlockSpec(shape, idx, pipeline_mode=pl.Buffered(1))
        except TypeError:
            pass
    return pl.BlockSpec(shape, idx)


# ----------------------------------------------------------------------------
# Wrapper: one pallas_call for the full MLP forward
# ----------------------------------------------------------------------------
def mlp_forward_pallas(x, params, sigmoid_output=False, *, out_dim=None,
                       max_tm=512, vmem_budget_bytes=48 * 1024 * 1024):
    """Fused y = MLP(x).

    `params` is a list of (w:(in,out), b:(1,out)); the last layer may already be
    zero-padded to a lane-dense width (multiple of 128). `out_dim` is the
    logical output width (sliced back in the wrapper).
    """
    M, K = x.shape
    num_layers = len(params)
    n_pad = params[-1][0].shape[1]
    if out_dim is None:
        out_dim = n_pad
    compute_dtype = params[0][0].dtype

    # --- row tile selection --------------------------------------------------
    # Multiple of 8 sublanes; >= 2 grid steps whenever M > 8 so the "parallel"
    # batch axis can be sharded across v7x's two TensorCores.
    if M <= 8:
        tm = M
    else:
        tm = min(_round_up(max_tm, 8), _round_up(pl.cdiv(M, 2), 8))

    def vmem_estimate(tm_, wb_bufs):
        est = 2 * tm_ * K * x.dtype.itemsize              # x tile, double-buffered
        est += 2 * tm_ * n_pad * x.dtype.itemsize         # out tile, double-buffered
        widest = max([K] + [w.shape[1] for (w, _) in params])
        est += 2 * tm_ * widest * 4                       # live intermediate h (f32)
        for (w, b) in params:
            est += wb_bufs * (w.size * w.dtype.itemsize + b.size * b.dtype.itemsize)
        return est

    # Shrink the row tile if the resident footprint would blow a v7x-safe budget.
    while tm > 8 and vmem_estimate(tm, 1) > vmem_budget_bytes:
        tm = max(8, _round_up(tm // 2, 8))
    grid = (pl.cdiv(M, tm),)   # ragged last block handled by Pallas boundary masking
    # TODO(synk): for hidden dims >= 2048 f32 a K/N grid axis with a pl.when
    # accumulator would avoid keeping every layer's full W resident on v7x.

    # --- cost estimate (logical work) ----------------------------------------
    flops = sum(2 * M * w.shape[0] * w.shape[1] for (w, _) in params)
    bytes_accessed = (x.size * x.dtype.itemsize
                      + M * n_pad * x.dtype.itemsize
                      + sum(w.size * w.dtype.itemsize + b.size * b.dtype.itemsize
                            for (w, b) in params))
    transcendentals = M * n_pad if sigmoid_output else 0

    kernel = functools.partial(
        _fused_mlp_kernel, num_layers=num_layers,
        sigmoid_output=sigmoid_output, compute_dtype=compute_dtype)

    def run(single_buffer_weights):
        in_specs = [pl.BlockSpec((tm, K), lambda i: (i, 0))]       # x row tile
        flat_inputs = [x]
        for (w, b) in params:
            in_specs.append(_const_spec(w.shape, single_buffer_weights))
            in_specs.append(_const_spec(b.shape, single_buffer_weights))
            flat_inputs.append(w)
            flat_inputs.append(b)
        wb_bufs = 1 if single_buffer_weights else 2
        vmem_limit = int(min(64 * 1024 * 1024,
                             max(16 * 1024 * 1024,
                                 1.5 * vmem_estimate(tm, wb_bufs) + (2 << 20))))
        return pl.pallas_call(
            kernel,
            out_shape=jax.ShapeDtypeStruct((M, n_pad), x.dtype),
            grid_spec=pltpu.PrefetchScalarGridSpec(
                num_scalar_prefetch=0,
                grid=grid,
                in_specs=in_specs,
                out_specs=pl.BlockSpec((tm, n_pad), lambda i: (i, 0)),
            ),
            compiler_params=pltpu.CompilerParams(
                dimension_semantics=("parallel",),
                vmem_limit_bytes=vmem_limit,
            ),
            cost_estimate=pl.CostEstimate(
                flops=flops,
                transcendentals=transcendentals,
                bytes_accessed=bytes_accessed,
            ),
        )(*flat_inputs)

    try:
        out = run(single_buffer_weights=True)
    except Exception:
        # pipeline_mode=pl.Buffered(1) unsupported on this jax build: fall back
        # to default (double-buffered) resident weights.
        out = run(single_buffer_weights=False)

    if out_dim != n_pad:
        out = out[:, :out_dim]
    return out


# ----------------------------------------------------------------------------
# MLP module (parameter setup = glue; the whole forward runs in ONE kernel)
# ----------------------------------------------------------------------------
class MLP:
    def __init__(self, input_dim, hidden_dim, output_dim, num_layers,
                 sigmoid_output=False, *, key=None,
                 param_dtype=jnp.float32, compute_dtype=jnp.bfloat16):
        self.num_layers = num_layers
        self.sigmoid_output = sigmoid_output
        self.output_dim = output_dim
        h = [hidden_dim] * (num_layers - 1)
        dims = list(zip([input_dim] + h, h + [output_dim]))

        if key is None:
            key = jax.random.PRNGKey(0)
        n_last_pad = _round_up(dims[-1][1], 128)
        self.params = []
        for li, (n_in, n_out) in enumerate(dims):
            key, kw, kb = jax.random.split(key, 3)
            bound = 1.0 / float(n_in) ** 0.5       # nn.Linear default init range
            w = jax.random.uniform(kw, (n_in, n_out), param_dtype, -bound, bound)
            b = jax.random.uniform(kb, (n_out,), param_dtype, -bound, bound)
            if li == num_layers - 1 and n_out != n_last_pad:
                # Lane-dense output head: zero-pad to a multiple of 128 so the
                # final store is an unmasked vst; sliced back in the wrapper.
                w = jnp.pad(w, ((0, 0), (0, n_last_pad - n_out)))
                b = jnp.pad(b, ((0, n_last_pad - n_out),))
            # Pre-transposed (in,out), bf16 weights for the MXU; f32 (1,N) bias.
            self.params.append((w.astype(compute_dtype),
                                b.reshape(1, -1).astype(jnp.float32)))

    def __call__(self, x):
        return mlp_forward_pallas(x, self.params,
                                  sigmoid_output=self.sigmoid_output,
                                  out_dim=self.output_dim)

    # pure-JAX reference using the exact same (bf16, lane-padded) parameters
    def reference(self, x):
        hdt = self.params[0][0].dtype
        h = x.astype(hdt)
        for i, (w, b) in enumerate(self.params):
            h = jnp.dot(h, w, preferred_element_type=jnp.float32) + b
            if i < self.num_layers - 1:
                h = jnp.maximum(h, 0.0).astype(hdt)
        if self.sigmoid_output:
            h = jax.nn.sigmoid(h)
        return h.astype(x.dtype)[:, :self.output_dim]


if __name__ == "__main__":
    key = jax.random.PRNGKey(0)
    k_x, k_p = jax.random.split(key)

    batch = 16
    input_dim, hidden_dim, output_dim, num_layers = 32, 32, 16, 3

    x = jax.random.normal(k_x, (batch, input_dim), jnp.float32)

    mlp = MLP(input_dim, hidden_dim, output_dim, num_layers,
              sigmoid_output=True, key=k_p)

    out = jax.block_until_ready(mlp(x))
    ref = jax.block_until_ready(mlp.reference(x))

    assert out.shape == (batch, output_dim)
    assert bool(jnp.all(jnp.isfinite(out)))
    assert jnp.allclose(out, ref, atol=1e-2, rtol=1e-2), "mismatch vs reference"

    print("KERNEL_OK")
</pallas_src>

<mosaic_0001>
module attributes {stable_mosaic.version = 11 : i64} {
  func.func @_fused_mlp_kernel(%arg0: i32, %arg1: memref<8x32xf32, #tpu.memory_space<vmem>>, %arg2: memref<32x32xbf16, #tpu.memory_space<vmem>>, %arg3: memref<1x32xf32, #tpu.memory_space<vmem>>, %arg4: memref<32x32xbf16, #tpu.memory_space<vmem>>, %arg5: memref<1x32xf32, #tpu.memory_space<vmem>>, %arg6: memref<32x128xbf16, #tpu.memory_space<vmem>>, %arg7: memref<1x128xf32, #tpu.memory_space<vmem>>, %arg8: memref<8x128xf32, #tpu.memory_space<vmem>>) attributes {dimension_semantics = [#tpu.dimension_semantics<parallel>], iteration_bounds = array<i64: 2>, scalar_prefetch = 0 : i64, scratch_operands = 0 : i64, tpu.core_type = #tpu.core_type<tc>, window_params = [{transform_indices = @transform_0, window_bounds = array<i64: 8, 32>}, {pipeline_mode = #tpu.pipeline_mode<synchronous>, transform_indices = @transform_1, window_bounds = array<i64: 32, 32>}, {pipeline_mode = #tpu.pipeline_mode<synchronous>, transform_indices = @transform_2, window_bounds = array<i64: 1, 32>}, {pipeline_mode = #tpu.pipeline_mode<synchronous>, transform_indices = @transform_3, window_bounds = array<i64: 32, 32>}, {pipeline_mode = #tpu.pipeline_mode<synchronous>, transform_indices = @transform_4, window_bounds = array<i64: 1, 32>}, {pipeline_mode = #tpu.pipeline_mode<synchronous>, transform_indices = @transform_5, window_bounds = array<i64: 32, 128>}, {pipeline_mode = #tpu.pipeline_mode<synchronous>, transform_indices = @transform_6, window_bounds = array<i64: 1, 128>}, {transform_indices = @transform_7, window_bounds = array<i64: 8, 128>}]} {
    %c0 = arith.constant 0 : index
    %c0_0 = arith.constant 0 : index
    %0 = vector.load %arg1[%c0, %c0_0] : memref<8x32xf32, #tpu.memory_space<vmem>>, vector<8x32xf32>
    %1 = arith.truncf %0 : vector<8x32xf32> to vector<8x32xbf16>
    %c0_1 = arith.constant 0 : index
    %c0_2 = arith.constant 0 : index
    %2 = vector.load %arg2[%c0_1, %c0_2] : memref<32x32xbf16, #tpu.memory_space<vmem>>, vector<32x32xbf16>
    %c0_3 = arith.constant 0 : index
    %c0_4 = arith.constant 0 : index
    %3 = vector.load %arg3[%c0_3, %c0_4] : memref<1x32xf32, #tpu.memory_space<vmem>>, vector<1x32xf32>
    %cst = arith.constant dense<0.000000e+00> : vector<8x32xf32>
    %4 = tpu.matmul %1, %2, %cst {dimension_numbers = #tpu.dot_dimension_numbers<[1], [0], [0], [1], [0, 0, 1, 1], [], []>} : vector<8x32xbf16>, vector<32x32xbf16>, vector<8x32xf32> -> vector<8x32xf32>
    %5 = vector.broadcast %3 : vector<1x32xf32> to vector<8x32xf32>
    %6 = arith.addf %4, %5 : vector<8x32xf32>
    %cst_5 = arith.constant 0.000000e+00 : f32
    %7 = vector.broadcast %cst_5 : f32 to vector<8x32xf32>
    %8 = arith.maximumf %6, %7 : vector<8x32xf32>
    %9 = arith.truncf %8 : vector<8x32xf32> to vector<8x32xbf16>
    %c0_6 = arith.constant 0 : index
    %c0_7 = arith.constant 0 : index
    %10 = vector.load %arg4[%c0_6, %c0_7] : memref<32x32xbf16, #tpu.memory_space<vmem>>, vector<32x32xbf16>
    %c0_8 = arith.constant 0 : index
    %c0_9 = arith.constant 0 : index
    %11 = vector.load %arg5[%c0_8, %c0_9] : memref<1x32xf32, #tpu.memory_space<vmem>>, vector<1x32xf32>
    %cst_10 = arith.constant dense<0.000000e+00> : vector<8x32xf32>
    %12 = tpu.matmul %9, %10, %cst_10 {dimension_numbers = #tpu.dot_dimension_numbers<[1], [0], [0], [1], [0, 0, 1, 1], [], []>} : vector<8x32xbf16>, vector<32x32xbf16>, vector<8x32xf32> -> vector<8x32xf32>
    %13 = vector.broadcast %11 : vector<1x32xf32> to vector<8x32xf32>
    %14 = arith.addf %12, %13 : vector<8x32xf32>
    %cst_11 = arith.constant 0.000000e+00 : f32
    %15 = vector.broadcast %cst_11 : f32 to vector<8x32xf32>
    %16 = arith.maximumf %14, %15 : vector<8x32xf32>
    %17 = arith.truncf %16 : vector<8x32xf32> to vector<8x32xbf16>
    %c0_12 = arith.constant 0 : index
    %c0_13 = arith.constant 0 : index
    %18 = vector.load %arg6[%c0_12, %c0_13] : memref<32x128xbf16, #tpu.memory_space<vmem>>, vector<32x128xbf16>
    %c0_14 = arith.constant 0 : index
    %c0_15 = arith.constant 0 : index
    %19 = vector.load %arg7[%c0_14, %c0_15] : memref<1x128xf32, #tpu.memory_space<vmem>>, vector<1x128xf32>
    %cst_16 = arith.constant dense<0.000000e+00> : vector<8x128xf32>
    %20 = tpu.matmul %17, %18, %cst_16 {dimension_numbers = #tpu.dot_dimension_numbers<[1], [0], [0], [1], [0, 0, 1, 1], [], []>} : vector<8x32xbf16>, vector<32x128xbf16>, vector<8x128xf32> -> vector<8x128xf32>
    %21 = vector.broadcast %19 : vector<1x128xf32> to vector<8x128xf32>
    %22 = arith.addf %20, %21 : vector<8x128xf32>
    %23 = arith.negf %22 : vector<8x128xf32>
    %24 = math.exp %23 : vector<8x128xf32>
    %cst_17 = arith.constant 1.000000e+00 : f32
    %25 = vector.broadcast %cst_17 : f32 to vector<8x128xf32>
    %26 = arith.addf %25, %24 : vector<8x128xf32>
    %27 = arith.divf %25, %26 : vector<8x128xf32>
    %c0_18 = arith.constant 0 : index
    %c0_19 = arith.constant 0 : index
    %28 = vector.load %arg8[%c0_18, %c0_19] : memref<8x128xf32, #tpu.memory_space<vmem>>, vector<8x128xf32>
    tpu.vector_store %arg8[%c0_18, %c0_19], %27 {strides = array<i32>} : memref<8x128xf32, #tpu.memory_space<vmem>>, vector<8x128xf32>,
    return
  }
  func.func @transform_0(%arg0: i32) -> (i32, i32) {
    %c0_i32 = arith.constant 0 : i32
    %c0_i32_0 = arith.constant 0 : i32
    return %arg0, %c0_i32 : i32, i32
  }
  func.func @transform_1(%arg0: i32) -> (i32, i32) {
    %c0_i32 = arith.constant 0 : i32
    %c0_i32_0 = arith.constant 0 : i32
    %c0_i32_1 = arith.constant 0 : i32
    return %c0_i32, %c0_i32_0 : i32, i32
  }
  func.func @transform_2(%arg0: i32) -> (i32, i32) {
    %c0_i32 = arith.constant 0 : i32
    %c0_i32_0 = arith.constant 0 : i32
    %c0_i32_1 = arith.constant 0 : i32
    return %c0_i32, %c0_i32_0 : i32, i32
  }
  func.func @transform_3(%arg0: i32) -> (i32, i32) {
    %c0_i32 = arith.constant 0 : i32
    %c0_i32_0 = arith.constant 0 : i32
    %c0_i32_1 = arith.constant 0 : i32
    return %c0_i32, %c0_i32_0 : i32, i32
  }
  func.func @transform_4(%arg0: i32) -> (i32, i32) {
    %c0_i32 = arith.constant 0 : i32
    %c0_i32_0 = arith.constant 0 : i32
    %c0_i32_1 = arith.constant 0 : i32
    return %c0_i32, %c0_i32_0 : i32, i32
  }
  func.func @transform_5(%arg0: i32) -> (i32, i32) {
    %c0_i32 = arith.constant 0 : i32
    %c0_i32_0 = arith.constant 0 : i32
    %c0_i32_1 = arith.constant 0 : i32
    return %c0_i32, %c0_i32_0 : i32, i32
  }
  func.func @transform_6(%arg0: i32) -> (i32, i32) {
    %c0_i32 = arith.constant 0 : i32
    %c0_i32_0 = arith.constant 0 : i32
    %c0_i32_1 = arith.constant 0 : i32
    return %c0_i32, %c0_i32_0 : i32, i32
  }
  func.func @transform_7(%arg0: i32) -> (i32, i32) {
    %c0_i32 = arith.constant 0 : i32
    %c0_i32_0 = arith.constant 0 : i32
    return %arg0, %c0_i32 : i32, i32
  }
}

module attributes {stable_mosaic.version = 11 : i64} {
  func.func @_fused_mlp_kernel(%arg0: i32, %arg1: memref<8x32xf32, #tpu.memory_space<vmem>>, %arg2: memref<32x32xbf16, #tpu.memory_space<vmem>>, %arg3: memref<1x32xf32, #tpu.memory_space<vmem>>, %arg4: memref<32x32xbf16, #tpu.memory_space<vmem>>, %arg5: memref<1x32xf32, #tpu.memory_space<vmem>>, %arg6: memref<32x128xbf16, #tpu.memory_space<vmem>>, %arg7: memref<1x128xf32, #tpu.memory_space<vmem>>, %arg8: memref<8x128xf32, #tpu.memory_space<vmem>>) attributes {dimension_semantics = [#tpu.dimension_semantics<parallel>], iteration_bounds = array<i64: 2>, scalar_prefetch = 0 : i64, scratch_operands = 0 : i64, tpu.core_type = #tpu.core_type<tc>, window_params = [{transform_indices = @transform_0, window_bounds = array<i64: 8, 32>}, {pipeline_mode = #tpu.pipeline_mode<synchronous>, transform_indices = @transform_1, window_bounds = array<i64: 32, 32>}, {pipeline_mode = #tpu.pipeline_mode<synchronous>, transform_indices = @transform_2, window_bounds = array<i64: 1, 32>}, {pipeline_mode = #tpu.pipeline_mode<synchronous>, transform_indices = @transform_3, window_bounds = array<i64: 32, 32>}, {pipeline_mode = #tpu.pipeline_mode<synchronous>, transform_indices = @transform_4, window_bounds = array<i64: 1, 32>}, {pipeline_mode = #tpu.pipeline_mode<synchronous>, transform_indices = @transform_5, window_bounds = array<i64: 32, 128>}, {pipeline_mode = #tpu.pipeline_mode<synchronous>, transform_indices = @transform_6, window_bounds = array<i64: 1, 128>}, {transform_indices = @transform_7, window_bounds = array<i64: 8, 128>}]} {
    %c0 = arith.constant 0 : index
    %c0_0 = arith.constant 0 : index
    %0 = vector.load %arg1[%c0, %c0_0] : memref<8x32xf32, #tpu.memory_space<vmem>>, vector<8x32xf32>
    %1 = arith.truncf %0 : vector<8x32xf32> to vector<8x32xbf16>
    %c0_1 = arith.constant 0 : index
    %c0_2 = arith.constant 0 : index
    %2 = vector.load %arg2[%c0_1, %c0_2] : memref<32x32xbf16, #tpu.memory_space<vmem>>, vector<32x32xbf16>
    %c0_3 = arith.constant 0 : index
    %c0_4 = arith.constant 0 : index
    %3 = vector.load %arg3[%c0_3, %c0_4] : memref<1x32xf32, #tpu.memory_space<vmem>>, vector<1x32xf32>
    %cst = arith.constant dense<0.000000e+00> : vector<8x32xf32>
    %4 = tpu.matmul %1, %2, %cst {dimension_numbers = #tpu.dot_dimension_numbers<[1], [0], [0], [1], [0, 0, 1, 1], [], []>} : vector<8x32xbf16>, vector<32x32xbf16>, vector<8x32xf32> -> vector<8x32xf32>
    %5 = vector.broadcast %3 : vector<1x32xf32> to vector<8x32xf32>
    %6 = arith.addf %4, %5 : vector<8x32xf32>
    %cst_5 = arith.constant 0.000000e+00 : f32
    %7 = vector.broadcast %cst_5 : f32 to vector<8x32xf32>
    %8 = arith.maximumf %6, %7 : vector<8x32xf32>
    %9 = arith.truncf %8 : vector<8x32xf32> to vector<8x32xbf16>
    %c0_6 = arith.constant 0 : index
    %c0_7 = arith.constant 0 : index
    %10 = vector.load %arg4[%c0_6, %c0_7] : memref<32x32xbf16, #tpu.memory_space<vmem>>, vector<32x32xbf16>
    %c0_8 = arith.constant 0 : index
    %c0_9 = arith.constant 0 : index
    %11 = vector.load %arg5[%c0_8, %c0_9] : memref<1x32xf32, #tpu.memory_space<vmem>>, vector<1x32xf32>
    %cst_10 = arith.constant dense<0.000000e+00> : vector<8x32xf32>
    %12 = tpu.matmul %9, %10, %cst_10 {dimension_numbers = #tpu.dot_dimension_numbers<[1], [0], [0], [1], [0, 0, 1, 1], [], []>} : vector<8x32xbf16>, vector<32x32xbf16>, vector<8x32xf32> -> vector<8x32xf32>
    %13 = vector.broadcast %11 : vector<1x32xf32> to vector<8x32xf32>
    %14 = arith.addf %12, %13 : vector<8x32xf32>
    %cst_11 = arith.constant 0.000000e+00 : f32
    %15 = vector.broadcast %cst_11 : f32 to vector<8x32xf32>
    %16 = arith.maximumf %14, %15 : vector<8x32xf32>
    %17 = arith.truncf %16 : vector<8x32xf32> to vector<8x32xbf16>
    %c0_12 = arith.constant 0 : index
    %c0_13 = arith.constant 0 : index
    %18 = vector.load %arg6[%c0_12, %c0_13] : memref<32x128xbf16, #tpu.memory_space<vmem>>, vector<32x128xbf16>
    %c0_14 = arith.constant 0 : index
    %c0_15 = arith.constant 0 : index
    %19 = vector.load %arg7[%c0_14, %c0_15] : memref<1x128xf32, #tpu.memory_space<vmem>>, vector<1x128xf32>
    %cst_16 = arith.constant dense<0.000000e+00> : vector<8x128xf32>
    %20 = tpu.matmul %17, %18, %cst_16 {dimension_numbers = #tpu.dot_dimension_numbers<[1], [0], [0], [1], [0, 0, 1, 1], [], []>} : vector<8x32xbf16>, vector<32x128xbf16>, vector<8x128xf32> -> vector<8x128xf32>
    %21 = vector.broadcast %19 : vector<1x128xf32> to vector<8x128xf32>
    %22 = arith.addf %20, %21 : vector<8x128xf32>
    %23 = arith.negf %22 : vector<8x128xf32>
    %24 = math.exp %23 : vector<8x128xf32>
    %cst_17 = arith.constant 1.000000e+00 : f32
    %25 = vector.broadcast %cst_17 : f32 to vector<8x128xf32>
    %26 = arith.addf %25, %24 : vector<8x128xf32>
    %27 = arith.divf %25, %26 : vector<8x128xf32>
    %c0_18 = arith.constant 0 : index
    %c0_19 = arith.constant 0 : index
    %28 = vector.load %arg8[%c0_18, %c0_19] : memref<8x128xf32, #tpu.memory_space<vmem>>, vector<8x128xf32>
    tpu.vector_store %arg8[%c0_18, %c0_19], %27 {strides = array<i32>} : memref<8x128xf32, #tpu.memory_space<vmem>>, vector<8x128xf32>,
    return
  }
  func.func @transform_0(%arg0: i32) -> (i32, i32) {
    %c0_i32 = arith.constant 0 : i32
    %c0_i32_0 = arith.constant 0 : i32
    return %arg0, %c0_i32 : i32, i32
  }
  func.func @transform_1(%arg0: i32) -> (i32, i32) {
    %c0_i32 = arith.constant 0 : i32
    %c0_i32_0 = arith.constant 0 : i32
    %c0_i32_1 = arith.constant 0 : i32
    return %c0_i32, %c0_i32_0 : i32, i32
  }
  func.func @transform_2(%arg0: i32) -> (i32, i32) {
    %c0_i32 = arith.constant 0 : i32
    %c0_i32_0 = arith.constant 0 : i32
    %c0_i32_1 = arith.constant 0 : i32
    return %c0_i32, %c0_i32_0 : i32, i32
  }
  func.func @transform_3(%arg0: i32) -> (i32, i32) {
    %c0_i32 = arith.constant 0 : i32
    %c0_i32_0 = arith.constant 0 : i32
    %c0_i32_1 = arith.constant 0 : i32
    return %c0_i32, %c0_i32_0 : i32, i32
  }
  func.func @transform_4(%arg0: i32) -> (i32, i32) {
    %c0_i32 = arith.constant 0 : i32
    %c0_i32_0 = arith.constant 0 : i32
    %c0_i32_1 = arith.constant 0 : i32
    return %c0_i32, %c0_i32_0 : i32, i32
  }
  func.func @transform_5(%arg0: i32) -> (i32, i32) {
    %c0_i32 = arith.constant 0 : i32
    %c0_i32_0 = arith.constant 0 : i32
    %c0_i32_1 = arith.constant 0 : i32
    return %c0_i32, %c0_i32_0 : i32, i32
  }
  func.func @transform_6(%arg0: i32) -> (i32, i32) {
    %c0_i32 = arith.constant 0 : i32
    %c0_i32_0 = arith.constant 0 : i32
    %c0_i32_1 = arith.constant 0 : i32
    return %c0_i32, %c0_i32_0 : i32, i32
  }
  func.func @transform_7(%arg0: i32) -> (i32, i32) {
    %c0_i32 = arith.constant 0 : i32
    %c0_i32_0 = arith.constant 0 : i32
    return %arg0, %c0_i32 : i32, i32
  }
}

</mosaic_0001>

<llo_original>
// kernel: tpu_custom_call.1
$region0: #{tpu_custom_call.1}
  #allocation0 [shape = 'u32[]', space=smem, size = 0x4, offset = 0x4, fixed_abs, tag = 'smem constant byte address 0x4 - core index']
  #allocation1 [shape = 'u32[144,128]{1,0:T(1,128)}', space=vmem, size = 0x12000, scoped, tag = 'internal scratch']
  %s0 = inlined_call_operand.hbm [shape: f32[16,32], index: 0, kind: input, shape index: {}]
  %s1 = inlined_call_operand.hbm [shape: bf16[32,32], index: 1, kind: input, shape index: {}]
  %s2 = inlined_call_operand.vmem [shape: f32[1,32], index: 2, kind: input, shape index: {}]
  %s3 = inlined_call_operand.hbm [shape: bf16[32,32], index: 3, kind: input, shape index: {}]
  %s4 = inlined_call_operand.vmem [shape: f32[1,32], index: 4, kind: input, shape index: {}]
  %s5 = inlined_call_operand.vmem [shape: bf16[32,128], index: 5, kind: input, shape index: {}]
  %s6 = inlined_call_operand.vmem [shape: f32[1,128], index: 6, kind: input, shape index: {}]
  %s7 = inlined_call_operand.hbm [shape: f32[16,128], index: 7, kind: output, shape index: {}]
  %s8 = sld [smem:[#allocation0]]
  $region73: #{tpu_custom_call.1} parent=0
    _
  %s10 = ssub.s32 1, %s8
  %s11 = scalar_select 0, %s10, %s8
  $region1: #{tpu_custom_call.1} parent=0
    #allocation2 [shape = 'u8[8192]{0}', space=vmem, size = 0x2000, scoped, tag = 'input window, operand 0']
    #allocation3 [shape = 's32[2]{0}', space=sflag, size = 0x8, scoped, tag = 'scoped memory for tpu_custom_call.1']
    #allocation4 [shape = 's32[2]{0}', space=sflag, size = 0x8, scoped, tag = 'scoped memory for tpu_custom_call.1']
    #allocation5 [shape = 'u8[8192]{0}', space=vmem, size = 0x2000, scoped, tag = 'input window, operand 1, single buffered']
    #allocation6 [shape = 's32[1]{0}', space=sflag, size = 0x4, scoped, tag = 'scoped memory for tpu_custom_call.1']
    #allocation7 [shape = 'u8[8192]{0}', space=vmem, size = 0x2000, scoped, tag = 'input window, operand 3, single buffered']
    #allocation8 [shape = 'u8[8192]{0}', space=vmem, size = 0x2000, scoped, tag = 'output window, operand 0']
    %12 = vsyncpa [#allocation3], 0
    %s13 = scalar_lea.sflag [#allocation3], 1
    %14 = vsyncpa %s13, 0
    %15 = vsyncpa [#allocation6], 0
    %16 = vsyncpa [#allocation4], 0
    %s17 = scalar_lea.sflag [#allocation4], 1
    %18 = vsyncpa %s17, 0
    loop: start=0, step=1, limit=4
    $region2: #{tpu_custom_call.1} parent=1 // loop_pre_header
      _
    $region3: #{tpu_custom_call.1} parent=1 // loop_header
      %s20 = sphi 0, %s24
      %p21 = scmp.ge.s32.totalorder %s20, 4
      %s30 = sphi 0, %s32
      %s33 = sphi 0, %s30
      %s34 = sphi 0, %s33
      %s50 = sphi 0, %s34
      %s54 = sphi 0, %s54
      %s56 = sphi 0, %s54
      %s57 = sphi 0, %s56
      %s71 = sphi 0, %s57
      %s75 = sphi 0, %s75
      %s77 = sphi 0, %s75
      %s78 = sphi 0, %s77
      %s92 = sphi 0, %s78
      %s96 = sphi 0, %s96
      %s98 = sphi 0, %s96
      %s99 = sphi 0, %s98
      %s113 = sphi 0, %s99
      %s117 = sphi 0, %s117
      %s119 = sphi 0, %s117
      %s120 = sphi 0, %s119
      %s134 = sphi 0, %s120
      %s138 = sphi 0, %s138
      %s140 = sphi 0, %s138
      %s141 = sphi 0, %s140
      %s155 = sphi 0, %s141
      %s159 = sphi 0, %s159
      %s161 = sphi 0, %s159
      %s162 = sphi 0, %s161
      %s176 = sphi 0, %s162
      %s182 = sphi 0, %s184
      %s185 = sphi 0, %s182
      %s186 = sphi 0, %s185
      %s202 = sphi 0, %s186
    $region4: #{tpu_custom_call.1} parent=1 // loop_header_branch
      %23 = sbr.rel (%p21) target = $region8
    $region5: #{tpu_custom_call.1} parent=1 // loop_body
      %s25 = ssub.s32 %s20, 1
      %s26 = ssub.s32 %s20, 2
      %s27 = sadd.s32 %s20, 1
      %s28 = ssub.s32 %s20, %s27
      %p29 = scmp.eq.s32.totalorder %s28, 0
      %s31 = sadd.s32 %s30, 1
      %s32 = scalar_select %p29, %s30, %s31
      %p35 = pneg %p29
      %p36 = scmp.eq.s32.totalorder %s20, 1
      %p37 = por %p35, %p36
      %p38 = scmp.ne.s32.totalorder %s30, %s33
      %p39 = scmp.eq.s32.totalorder %s20, 0
      %p40 = por %p38, %p39
      %p41 = scmp.ne.s32.totalorder %s30, %s33
      %p42 = scmp.eq.s32.totalorder %s25, 1
      %p43 = por %p41, %p42
      %p44 = scmp.ne.s32.totalorder %s33, %s34
      %p45 = scmp.eq.s32.totalorder %s25, 0
      %p46 = por %p44, %p45
      %p47 = scmp.ne.s32.totalorder %s33, %s34
      %p48 = scmp.eq.s32.totalorder %s26, 1
      %p49 = por %p47, %p48
      %p51 = scmp.ne.s32.totalorder %s34, %s50
      %p52 = scmp.eq.s32.totalorder %s26, 0
      %p53 = por %p51, %p52
      %s55 = sadd.s32 %s54, 1
      %p58 = scmp.eq.s32.totalorder %s20, 1
      %p59 = scmp.ne.s32.totalorder %s54, %s56
      %p60 = scmp.eq.s32.totalorder %s20, 0
      %p61 = por %p59, %p60
      %p62 = scmp.ne.s32.totalorder %s54, %s56
      %p63 = scmp.eq.s32.totalorder %s25, 1
      %p64 = por %p62, %p63
      %p65 = scmp.ne.s32.totalorder %s56, %s57
      %p66 = scmp.eq.s32.totalorder %s25, 0
      %p67 = por %p65, %p66
      %p68 = scmp.ne.s32.totalorder %s56, %s57
      %p69 = scmp.eq.s32.totalorder %s26, 1
      %p70 = por %p68, %p69
      %p72 = scmp.ne.s32.totalorder %s57, %s71
      %p73 = scmp.eq.s32.totalorder %s26, 0
      %p74 = por %p72, %p73
      %s76 = sadd.s32 %s75, 1
      %p79 = scmp.eq.s32.totalorder %s20, 1
      %p80 = scmp.ne.s32.totalorder %s75, %s77
      %p81 = scmp.eq.s32.totalorder %s20, 0
      %p82 = por %p80, %p81
      %p83 = scmp.ne.s32.totalorder %s75, %s77
      %p84 = scmp.eq.s32.totalorder %s25, 1
      %p85 = por %p83, %p84
      %p86 = scmp.ne.s32.totalorder %s77, %s78
      %p87 = scmp.eq.s32.totalorder %s25, 0
      %p88 = por %p86, %p87
      %p89 = scmp.ne.s32.totalorder %s77, %s78
      %p90 = scmp.eq.s32.totalorder %s26, 1
      %p91 = por %p89, %p90
      %p93 = scmp.ne.s32.totalorder %s78, %s92
      %p94 = scmp.eq.s32.totalorder %s26, 0
      %p95 = por %p93, %p94
      %s97 = sadd.s32 %s96, 1
      %p100 = scmp.eq.s32.totalorder %s20, 1
      %p101 = scmp.ne.s32.totalorder %s96, %s98
      %p102 = scmp.eq.s32.totalorder %s20, 0
      %p103 = por %p101, %p102
      %p104 = scmp.ne.s32.totalorder %s96, %s98
      %p105 = scmp.eq.s32.totalorder %s25, 1
      %p106 = por %p104, %p105
      %p107 = scmp.ne.s32.totalorder %s98, %s99
      %p108 = scmp.eq.s32.totalorder %s25, 0
      %p109 = por %p107, %p108
      %p110 = scmp.ne.s32.totalorder %s98, %s99
      %p111 = scmp.eq.s32.totalorder %s26, 1
      %p112 = por %p110, %p111
      %p114 = scmp.ne.s32.totalorder %s99, %s113
      %p115 = scmp.eq.s32.totalorder %s26, 0
      %p116 = por %p114, %p115
      %s118 = sadd.s32 %s117, 1
      %p121 = scmp.eq.s32.totalorder %s20, 1
      %p122 = scmp.ne.s32.totalorder %s117, %s119
      %p123 = scmp.eq.s32.totalorder %s20, 0
      %p124 = por %p122, %p123
      %p125 = scmp.ne.s32.totalorder %s117, %s119
      %p126 = scmp.eq.s32.totalorder %s25, 1
      %p127 = por %p125, %p126
      %p128 = scmp.ne.s32.totalorder %s119, %s120
      %p129 = scmp.eq.s32.totalorder %s25, 0
      %p130 = por %p128, %p129
      %p131 = scmp.ne.s32.totalorder %s119, %s120
      %p132 = scmp.eq.s32.totalorder %s26, 1
      %p133 = por %p131, %p132
      %p135 = scmp.ne.s32.totalorder %s120, %s134
      %p136 = scmp.eq.s32.totalorder %s26, 0
      %p137 = por %p135, %p136
      %s139 = sadd.s32 %s138, 1
      %p142 = scmp.eq.s32.totalorder %s20, 1
      %p143 = scmp.ne.s32.totalorder %s138, %s140
      %p144 = scmp.eq.s32.totalorder %s20, 0
      %p145 = por %p143, %p144
      %p146 = scmp.ne.s32.totalorder %s138, %s140
      %p147 = scmp.eq.s32.totalorder %s25, 1
      %p148 = por %p146, %p147
      %p149 = scmp.ne.s32.totalorder %s140, %s141
      %p150 = scmp.eq.s32.totalorder %s25, 0
      %p151 = por %p149, %p150
      %p152 = scmp.ne.s32.totalorder %s140, %s141
      %p153 = scmp.eq.s32.totalorder %s26, 1
      %p154 = por %p152, %p153
      %p156 = scmp.ne.s32.totalorder %s141, %s155
      %p157 = scmp.eq.s32.totalorder %s26, 0
      %p158 = por %p156, %p157
      %s160 = sadd.s32 %s159, 1
      %p163 = scmp.eq.s32.totalorder %s20, 1
      %p164 = scmp.ne.s32.totalorder %s159, %s161
      %p165 = scmp.eq.s32.totalorder %s20, 0
      %p166 = por %p164, %p165
      %p167 = scmp.ne.s32.totalorder %s159, %s161
      %p168 = scmp.eq.s32.totalorder %s25, 1
      %p169 = por %p167, %p168
      %p170 = scmp.ne.s32.totalorder %s161, %s162
      %p171 = scmp.eq.s32.totalorder %s25, 0
      %p172 = por %p170, %p171
      %p173 = scmp.ne.s32.totalorder %s161, %s162
      %p174 = scmp.eq.s32.totalorder %s26, 1
      %p175 = por %p173, %p174
      %p177 = scmp.ne.s32.totalorder %s162, %s176
      %p178 = scmp.eq.s32.totalorder %s26, 0
      %p179 = por %p177, %p178
      %s180 = ssub.s32 %s20, %s27
      %p181 = scmp.eq.s32.totalorder %s180, 0
      %s183 = sadd.s32 %s182, 1
      %s184 = scalar_select %p181, %s182, %s183
      %p187 = pneg %p181
      %p188 = scmp.eq.s32.totalorder %s20, 1
      %p189 = por %p187, %p188
      %p190 = scmp.ne.s32.totalorder %s182, %s185
      %p191 = scmp.eq.s32.totalorder %s20, 0
      %p192 = por %p190, %p191
      %p193 = scmp.ne.s32.totalorder %s182, %s185
      %p194 = scmp.eq.s32.totalorder %s25, 1
      %p195 = por %p193, %p194
      %p196 = scmp.ne.s32.totalorder %s185, %s186
      %p197 = scmp.eq.s32.totalorder %s25, 0
      %p198 = por %p196, %p197
      %p199 = scmp.ne.s32.totalorder %s185, %s186
      %p200 = scmp.eq.s32.totalorder %s26, 1
      %p201 = por %p199, %p200
      %p203 = scmp.ne.s32.totalorder %s186, %s202
      %p204 = scmp.eq.s32.totalorder %s26, 0
      %p205 = por %p203, %p204
      %p206 = scmp.le.s32.totalorder 1, %s20
      %p207 = scmp.lt.s32.totalorder %s20, 3
      %p208 = pnand %p206, %p207
      %p209 = pneg %p208
      // Predicated region
      $region9: #{tpu_custom_call.1} parent=5 // pred_check
        _
      $region10: #{tpu_custom_call.1} parent=5 // pred_check_branch
        %211 = sbr.rel (%p208) target = $region12
      $region11: #{tpu_custom_call.1} parent=5 // pred_region
        %s212 = ssub.s32 %s20, 1
        // Predicated region
        $region13: #{tpu_custom_call.1} parent=11 // pred_check
          %p213 = pneg %p67
        $region14: #{tpu_custom_call.1} parent=11 // pred_check_branch
          %215 = sbr.rel (%p213) target = $region16
        $region15: #{tpu_custom_call.1} parent=11 // pred_region
          %s217 = ssub.s32 256, 256
          %218 = vsyncadd [#allocation6], %s217
          %s219 = sshll.u32 [#allocation5], 4
          %s220 = int_to_ptr.vmem [resolvable:$true] %s219
          %225 = dma.hbm_to_vmem [thread:$0]  %s1, 256, %s220, [#allocation6], 64, 64, 4
        $region16: #{tpu_custom_call.1} parent=11 // pred_fallthru
          _
        // Predicated region
        $region17: #{tpu_custom_call.1} parent=11 // pred_check
          %p226 = pneg %p88
        $region18: #{tpu_custom_call.1} parent=11 // pred_check_branch
          %228 = sbr.rel (%p226) target = $region20
        $region19: #{tpu_custom_call.1} parent=11 // pred_region
          _
        $region20: #{tpu_custom_call.1} parent=11 // pred_fallthru
          _
        // Predicated region
        $region21: #{tpu_custom_call.1} parent=11 // pred_check
          %p229 = pneg %p109
        $region22: #{tpu_custom_call.1} parent=11 // pred_check_branch
          %231 = sbr.rel (%p229) target = $region24
        $region23: #{tpu_custom_call.1} parent=11 // pred_region
          %s233 = ssub.s32 256, 256
          %234 = vsyncadd [#allocation6], %s233
          %s235 = sshll.u32 [#allocation7], 4
          %s236 = int_to_ptr.vmem [resolvable:$true] %s235
          %241 = dma.hbm_to_vmem [thread:$0]  %s3, 256, %s236, [#allocation6], 64, 64, 4
        $region24: #{tpu_custom_call.1} parent=11 // pred_fallthru
          _
        // Predicated region
        $region25: #{tpu_custom_call.1} parent=11 // pred_check
          %p242 = pneg %p130
        $region26: #{tpu_custom_call.1} parent=11 // pred_check_branch
          %244 = sbr.rel (%p242) target = $region28
        $region27: #{tpu_custom_call.1} parent=11 // pred_region
          _
        $region28: #{tpu_custom_call.1} parent=11 // pred_fallthru
          _
        // Predicated region
        $region29: #{tpu_custom_call.1} parent=11 // pred_check
          %p245 = pneg %p151
        $region30: #{tpu_custom_call.1} parent=11 // pred_check_branch
          %247 = sbr.rel (%p245) target = $region32
        $region31: #{tpu_custom_call.1} parent=11 // pred_region
          _
        $region32: #{tpu_custom_call.1} parent=11 // pred_fallthru
          _
        // Predicated region
        $region33: #{tpu_custom_call.1} parent=11 // pred_check
          %p248 = pneg %p172
        $region34: #{tpu_custom_call.1} parent=11 // pred_check_branch
          %250 = sbr.rel (%p248) target = $region36
        $region35: #{tpu_custom_call.1} parent=11 // pred_region
          _
        $region36: #{tpu_custom_call.1} parent=11 // pred_fallthru
          _
      $region12: #{tpu_custom_call.1} parent=5 // pred_fallthru
        _
      %p251 = scmp.lt.s32.totalorder %s20, 2
      // Predicated region
      $region37: #{tpu_custom_call.1} parent=5 // pred_check
        %p252 = pneg %p251
      $region38: #{tpu_custom_call.1} parent=5 // pred_check_branch
        %254 = sbr.rel (%p252) target = $region40
      $region39: #{tpu_custom_call.1} parent=5 // pred_region
        // Predicated region
        $region41: #{tpu_custom_call.1} parent=39 // pred_check
          %p255 = pneg %p40
        $region42: #{tpu_custom_call.1} parent=39 // pred_check_branch
          %257 = sbr.rel (%p255) target = $region44
        $region43: #{tpu_custom_call.1} parent=39 // pred_region
          %s258 = sand.u32 %s30, 1
          %s259 = scalar_lea.sflag [#allocation3], %s258
          %s260 = sand.u32 %s30, 1
          %s261 = smul.addr %s260, 8
          %s262 = scalar_lea.vmem [#allocation2], %s261
          %s264 = ssub.s32 128, 128
          %265 = vsyncadd %s259, %s264
          %s266 = smul.addr %s20, 128
          %s267 = scalar_lea.hbm %s0, %s266
          %s269 = sshll.u32 %s262, 4
          %s270 = int_to_ptr.vmem [resolvable:$true] %s269
          %272 = dma.hbm_to_vmem [thread:$0]  %s267, 128, %s270, %s259
        $region44: #{tpu_custom_call.1} parent=39 // pred_fallthru
          _
      $region40: #{tpu_custom_call.1} parent=5 // pred_fallthru
        _
      %p273 = scmp.le.s32.totalorder 1, %s20
      %p274 = scmp.lt.s32.totalorder %s20, 3
      %p275 = pnand %p273, %p274
      %p276 = pneg %p275
      // Predicated region
      $region45: #{tpu_custom_call.1} parent=5 // pred_check
        _
      $region46: #{tpu_custom_call.1} parent=5 // pred_check_branch
        %278 = sbr.rel (%p275) target = $region48
      $region47: #{tpu_custom_call.1} parent=5 // pred_region
        %s279 = ssub.s32 %s20, 1
        %s280 = sand.u32 %s33, 1
        %s281 = scalar_lea.sflag [#allocation3], %s280
        %s282 = sand.u32 %s33, 1
        %s283 = smul.addr %s282, 8
        %s284 = scalar_lea.vmem [#allocation2], %s283
        // Predicated region
        $region49: #{tpu_custom_call.1} parent=47 // pred_check
          %p285 = pneg %p46
        $region50: #{tpu_custom_call.1} parent=47 // pred_check_branch
          %287 = sbr.rel (%p285) target = $region52
        $region51: #{tpu_custom_call.1} parent=47 // pred_region
          %288 = dma.done %s281, 128
        $region52: #{tpu_custom_call.1} parent=47 // pred_fallthru
          _
        // Predicated region
        $region53: #{tpu_custom_call.1} parent=47 // pred_check
          %p289 = pneg %p67
        $region54: #{tpu_custom_call.1} parent=47 // pred_check_branch
          %291 = sbr.rel (%p289) target = $region56
        $region55: #{tpu_custom_call.1} parent=47 // pred_region
          %292 = dma.done [#allocation6], 256
        $region56: #{tpu_custom_call.1} parent=47 // pred_fallthru
          _
        // Predicated region
        $region57: #{tpu_custom_call.1} parent=47 // pred_check
          %p293 = pneg %p109
        $region58: #{tpu_custom_call.1} parent=47 // pred_check_branch
          %295 = sbr.rel (%p293) target = $region60
        $region59: #{tpu_custom_call.1} parent=47 // pred_region
          %296 = dma.done [#allocation6], 256
        $region60: #{tpu_custom_call.1} parent=47 // pred_fallthru
          _
        %s297 = sand.u32 %s33, 1
        %s298 = scalar_lea.sflag [#allocation3], %s297
        %s299 = sand.u32 %s33, 1
        %s300 = smul.addr %s299, 8
        %s301 = scalar_lea.vmem [#allocation2], %s300
        %p302 = pneg %p46
        %p303 = pneg %p43
        %p304 = pneg %p67
        %p305 = pneg %p64
        %p306 = pneg %p88
        %p307 = pneg %p85
        %p308 = pneg %p109
        %p309 = pneg %p106
        %p310 = pneg %p130
        %p311 = pneg %p127
        %p312 = pneg %p151
        %p313 = pneg %p148
        %p314 = pneg %p172
        %p315 = pneg %p169
        %p316 = pneg %p198
        %p317 = pneg %p195
        %s318 = sand.u32 %s185, 1
        %s319 = scalar_lea.sflag [#allocation4], %s318
        %s320 = sand.u32 %s185, 1
        %s321 = smul.addr %s320, 8
        %s322 = scalar_lea.vmem [#allocation8], %s321
        %v324 = vld [vmem:[%s284] sm:$0xff]
        %v325 = vpack.c.bf16 %v324, %v324
        %v326 = vld [vmem:[#allocation5] sm:$0xf]
        %v327 = vld [vmem:[#allocation5 + $0x4] sm:$0xf]
        %v328 = vld [vmem:[#allocation5 + $0x8] sm:$0xf]
        %v329 = vld [vmem:[#allocation5 + $0xc] sm:$0xf]
        %v330 = vld [vmem:[%s2] sm:$0x1]
        %v332 = vlaneseq
        %v333 = vshrl.u32 %v332, 7
        %v334 = vsub.s32 0, %v333
        %v335 = vrot.slane %v330, %v334
        %v341 = vunpack.c.l.b16 %v326
        %v342 = vunpack.c.l.b16 %v327
        %v343 = vunpack.c.l.b16 %v328
        %v344 = vunpack.c.l.b16 %v329
        %v345 = vpack.c.b16 %v342, %v341
        %v346 = vpack.c.b16 %v344, %v343
        %vm349 = vcmask 261120
        %v351 = vsel %vm349, %v325, 0
        %353 = vmatprep.subr.bf16.mxu0 0
        %354 = vmatpush1.bf16.msra.mxu0 %v345
        %355 = vmatprep.subr.bf16.mxu0 0
        %356 = vmatpush1.bf16.msra.mxu0 %v346
        %357 = vmatprep.subr.bf16.mxu0 0
        %358 = vmatpush1.bf16.msra.mxu0 0
        %359 = vmatprep.subr.bf16.mxu0 0
        %360 = vmatpush1.bf16.msra.mxu0 0
        %361 = vmatprep.subr.bf16.mxu0 0
        %362 = vmatpush1.bf16.msra.mxu0 0
        %363 = vmatprep.subr.bf16.mxu0 0
        %364 = vmatpush1.bf16.msra.mxu0 0
        %365 = vmatprep.subr.bf16.mxu0 0
        %366 = vmatpush1.bf16.msra.mxu0 0
        %367 = vmatprep.subr.bf16.mxu0 0
        %368 = vmatpush1.bf16.msra.mxu0 0
        %369 = vmatprep.subr.bf16.mxu0 0
        %370 = vmatpush1.bf16.msra.mxu0 0
        %371 = vmatprep.subr.bf16.mxu0 0
        %372 = vmatpush1.bf16.msra.mxu0 0
        %373 = vmatprep.subr.bf16.mxu0 0
        %374 = vmatpush1.bf16.msra.mxu0 0
        %375 = vmatprep.subr.bf16.mxu0 0
        %376 = vmatpush1.bf16.msra.mxu0 0
        %377 = vmatprep.subr.bf16.mxu0 0
        %378 = vmatpush1.bf16.msra.mxu0 0
        %379 = vmatprep.subr.bf16.mxu0 0
        %380 = vmatpush1.bf16.msra.mxu0 0
        %381 = vmatprep.subr.bf16.mxu0 0
        %382 = vmatpush1.bf16.msra.mxu0 0
        %383 = vmatprep.subr.bf16.mxu0 0
        %384 = vmatpush1.bf16.msra.mxu0 0
        %385 = vmatprep.mubr.bf16.mxu0 0
        %386 = vmatmul.mubr.bf16.gmra.mrb[0].mxu0 %v351
        %v387 = vpop.f32.mrb[0].mxu0
        %v388 = vadd.f32 %v335, %v387
        %v389 = vpop.f32.mrb[0].mxu0
        %v390 = vpop.f32.mrb[0].mxu0
        %v391 = vpop.f32.mrb[0].mxu0
        %392 = vdwg.mxu0
        %v393 = vmax.f32 %v388, 0.0
        %v394 = vpack.c.bf16 %v393, %v393
        %v395 = vld [vmem:[#allocation7] sm:$0xf]
        %v396 = vld [vmem:[#allocation7 + $0x4] sm:$0xf]
        %v397 = vld [vmem:[#allocation7 + $0x8] sm:$0xf]
        %v398 = vld [vmem:[#allocation7 + $0xc] sm:$0xf]
        %v399 = vld [vmem:[%s4] sm:$0x1]
        %v401 = vlaneseq
        %v402 = vshrl.u32 %v401, 7
        %v403 = vsub.s32 0, %v402
        %v404 = vrot.slane %v399, %v403
        %v410 = vunpack.c.l.b16 %v395
        %v411 = vunpack.c.l.b16 %v396
        %v412 = vunpack.c.l.b16 %v397
        %v413 = vunpack.c.l.b16 %v398
        %v414 = vpack.c.b16 %v411, %v410
        %v415 = vpack.c.b16 %v413, %v412
        %v419 = vsel %vm349, %v394, 0
        %421 = vmatprep.subr.bf16.mxu0 0
        %422 = vmatpush1.bf16.msra.mxu0 %v414
        %423 = vmatprep.subr.bf16.mxu0 0
        %424 = vmatpush1.bf16.msra.mxu0 %v415
        %425 = vmatprep.subr.bf16.mxu0 0
        %426 = vmatpush1.bf16.msra.mxu0 0
        %427 = vmatprep.subr.bf16.mxu0 0
        %428 = vmatpush1.bf16.msra.mxu0 0
        %429 = vmatprep.subr.bf16.mxu0 0
        %430 = vmatpush1.bf16.msra.mxu0 0
        %431 = vmatprep.subr.bf16.mxu0 0
        %432 = vmatpush1.bf16.msra.mxu0 0
        %433 = vmatprep.subr.bf16.mxu0 0
        %434 = vmatpush1.bf16.msra.mxu0 0
        %435 = vmatprep.subr.bf16.mxu0 0
        %436 = vmatpush1.bf16.msra.mxu0 0
        %437 = vmatprep.subr.bf16.mxu0 0
        %438 = vmatpush1.bf16.msra.mxu0 0
        %439 = vmatprep.subr.bf16.mxu0 0
        %440 = vmatpush1.bf16.msra.mxu0 0
        %441 = vmatprep.subr.bf16.mxu0 0
        %442 = vmatpush1.bf16.msra.mxu0 0
        %443 = vmatprep.subr.bf16.mxu0 0
        %444 = vmatpush1.bf16.msra.mxu0 0
        %445 = vmatprep.subr.bf16.mxu0 0
        %446 = vmatpush1.bf16.msra.mxu0 0
        %447 = vmatprep.subr.bf16.mxu0 0
        %448 = vmatpush1.bf16.msra.mxu0 0
        %449 = vmatprep.subr.bf16.mxu0 0
        %450 = vmatpush1.bf16.msra.mxu0 0
        %451 = vmatprep.subr.bf16.mxu0 0
        %452 = vmatpush1.bf16.msra.mxu0 0
        %453 = vmatprep.mubr.bf16.mxu0 0
        %454 = vmatmul.mubr.bf16.gmra.mrb[0].mxu0 %v419
        %v455 = vpop.f32.mrb[0].mxu0
        %v456 = vadd.f32 %v404, %v455
        %v457 = vpop.f32.mrb[0].mxu0
        %v458 = vpop.f32.mrb[0].mxu0
        %v459 = vpop.f32.mrb[0].mxu0
        %460 = vdwg.mxu0
        %v461 = vmax.f32 %v456, 0.0
        %v462 = vpack.c.bf16 %v461, %v461
        %v463 = vld [vmem:[%s5] sm:$0xf]
        %v464 = vld [vmem:[%s5 + $0x4] sm:$0xf]
        %v465 = vld [vmem:[%s5 + $0x8] sm:$0xf]
        %v466 = vld [vmem:[%s5 + $0xc] sm:$0xf]
        %v467 = vld [vmem:[%s6] sm:$0x1]
        %v469 = vlaneseq
        %v470 = vshrl.u32 %v469, 7
        %v471 = vsub.s32 0, %v470
        %v472 = vrot.slane %v467, %v471
        %v478 = vunpack.c.l.b16 %v463
        %v479 = vunpack.c.l.b16 %v464
        %v480 = vunpack.c.l.b16 %v465
        %v481 = vunpack.c.l.b16 %v466
        %v482 = vpack.c.b16 %v479, %v478
        %v483 = vpack.c.b16 %v481, %v480
        %v487 = vsel %vm349, %v462, 0
        %489 = vmatprep.subr.bf16.mxu0 0
        %490 = vmatpush1.bf16.msra.mxu0 %v482
        %491 = vmatprep.subr.bf16.mxu0 0
        %492 = vmatpush1.bf16.msra.mxu0 %v483
        %493 = vmatprep.subr.bf16.mxu0 0
        %494 = vmatpush1.bf16.msra.mxu0 0
        %495 = vmatprep.subr.bf16.mxu0 0
        %496 = vmatpush1.bf16.msra.mxu0 0
        %497 = vmatprep.subr.bf16.mxu0 0
        %498 = vmatpush1.bf16.msra.mxu0 0
        %499 = vmatprep.subr.bf16.mxu0 0
        %500 = vmatpush1.bf16.msra.mxu0 0
        %501 = vmatprep.subr.bf16.mxu0 0
        %502 = vmatpush1.bf16.msra.mxu0 0
        %503 = vmatprep.subr.bf16.mxu0 0
        %504 = vmatpush1.bf16.msra.mxu0 0
        %505 = vmatprep.subr.bf16.mxu0 0
        %506 = vmatpush1.bf16.msra.mxu0 0
        %507 = vmatprep.subr.bf16.mxu0 0
        %508 = vmatpush1.bf16.msra.mxu0 0
        %509 = vmatprep.subr.bf16.mxu0 0
        %510 = vmatpush1.bf16.msra.mxu0 0
        %511 = vmatprep.subr.bf16.mxu0 0
        %512 = vmatpush1.bf16.msra.mxu0 0
        %513 = vmatprep.subr.bf16.mxu0 0
        %514 = vmatpush1.bf16.msra.mxu0 0
        %515 = vmatprep.subr.bf16.mxu0 0
        %516 = vmatpush1.bf16.msra.mxu0 0
        %517 = vmatprep.subr.bf16.mxu0 0
        %518 = vmatpush1.bf16.msra.mxu0 0
        %519 = vmatprep.subr.bf16.mxu0 0
        %520 = vmatpush1.bf16.msra.mxu0 0
        %521 = vmatprep.mubr.bf16.mxu0 0
        %522 = vmatmul.mubr.bf16.gmra.mrb[0].mxu0 %v487
        %v523 = vpop.f32.mrb[0].mxu0
        %v524 = vadd.f32 %v472, %v523
        %v525 = vpop.f32.mrb[0].mxu0
        %v526 = vpop.f32.mrb[0].mxu0
        %v527 = vpop.f32.mrb[0].mxu0
        %528 = vdwg.mxu0
        %v529 = vxor.u32 %v524, 2147483648
        %v530 = vmul.f32 %v529, 1.442695
        %v531 = vpow.pop %v530
        %v532 = vadd.f32 %v531, 1.0
        %v533 = vrcp.pop %v532
        %v534 = vmul.f32 1.0, %v533
        %535 = vst [vmem:[%s322] sm:$0xff] %v534
        %s536 = sand.u32 %s185, 1
        %s537 = scalar_lea.sflag [#allocation4], %s536
        %s538 = sand.u32 %s185, 1
        %s539 = smul.addr %s538, 8
        %s540 = scalar_lea.vmem [#allocation8], %s539
        // Predicated region
        $region61: #{tpu_custom_call.1} parent=47 // pred_check
          %p541 = pneg %p195
        $region62: #{tpu_custom_call.1} parent=47 // pred_check_branch
          %543 = sbr.rel (%p541) target = $region64
        $region63: #{tpu_custom_call.1} parent=47 // pred_region
          %s545 = ssub.s32 128, 128
          %546 = vsyncadd %s537, %s545
          %s547 = smul.addr %s25, 128
          %s548 = scalar_lea.hbm %s7, %s547
          %s550 = sshll.u32 %s540, 4
          %s551 = int_to_ptr.vmem [resolvable:$true] %s550
          %553 = dma.vmem_to_hbm [thread:$0]  %s551, 128, %s548, %s537
        $region64: #{tpu_custom_call.1} parent=47 // pred_fallthru
          _
      $region48: #{tpu_custom_call.1} parent=5 // pred_fallthru
        _
      %p554 = scmp.le.s32.totalorder 2, %s20
      // Predicated region
      $region65: #{tpu_custom_call.1} parent=5 // pred_check
        %p555 = pneg %p554
      $region66: #{tpu_custom_call.1} parent=5 // pred_check_branch
        %557 = sbr.rel (%p555) target = $region68
      $region67: #{tpu_custom_call.1} parent=5 // pred_region
        %s558 = ssub.s32 %s20, 2
        // Predicated region
        $region69: #{tpu_custom_call.1} parent=67 // pred_check
          %p559 = pneg %p201
        $region70: #{tpu_custom_call.1} parent=67 // pred_check_branch
          %561 = sbr.rel (%p559) target = $region72
        $region71: #{tpu_custom_call.1} parent=67 // pred_region
          %s562 = sand.u32 %s186, 1
          %s563 = scalar_lea.sflag [#allocation4], %s562
          %s564 = sand.u32 %s186, 1
          %s565 = smul.addr %s564, 8
          %s566 = scalar_lea.vmem [#allocation8], %s565
          %567 = dma.done %s563, 128
        $region72: #{tpu_custom_call.1} parent=67 // pred_fallthru
          _
      $region68: #{tpu_custom_call.1} parent=5 // pred_fallthru
        _
    $region6: #{tpu_custom_call.1} parent=1 // loop_footer
      %s24 = sadd.s32 1, %s20
    $region7: #{tpu_custom_call.1} parent=1 // loop_footer_branch
      %19 = sbr.rel target = $region3
    $region8: #{tpu_custom_call.1} parent=1 // loop_exit
      _
    %568 = vsyncpa [#allocation3], 1
    %s569 = scalar_lea.sflag [#allocation3], 1
    %570 = vsyncpa %s569, 1
    %571 = vsyncpa [#allocation6], 1
    %572 = vsyncpa [#allocation4], 1
    %s573 = scalar_lea.sflag [#allocation4], 1
    %574 = vsyncpa %s573, 1

// kernel: tpu_custom_call.1
$region0: #{tpu_custom_call.1}
  #allocation0 [shape = 'u32[]', space=smem, size = 0x4, offset = 0x4, fixed_abs, tag = 'smem constant byte address 0x4 - core index']
  #allocation1 [shape = 'u32[144,128]{1,0:T(1,128)}', space=vmem, size = 0x12000, scoped, tag = 'internal scratch']
  %s0 = inlined_call_operand.hbm [shape: f32[16,32], index: 0, kind: input, shape index: {}]
  %s1 = inlined_call_operand.hbm [shape: bf16[32,32], index: 1, kind: input, shape index: {}]
  %s2 = inlined_call_operand.vmem [shape: f32[1,32], index: 2, kind: input, shape index: {}]
  %s3 = inlined_call_operand.hbm [shape: bf16[32,32], index: 3, kind: input, shape index: {}]
  %s4 = inlined_call_operand.vmem [shape: f32[1,32], index: 4, kind: input, shape index: {}]
  %s5 = inlined_call_operand.vmem [shape: bf16[32,128], index: 5, kind: input, shape index: {}]
  %s6 = inlined_call_operand.vmem [shape: f32[1,128], index: 6, kind: input, shape index: {}]
  %s7 = inlined_call_operand.hbm [shape: f32[16,128], index: 7, kind: output, shape index: {}]
  %s8 = sld [smem:[#allocation0]]
  $region73: #{tpu_custom_call.1} parent=0
    _
  %s10 = ssub.s32 1, %s8
  %s11 = scalar_select 0, %s10, %s8
  $region1: #{tpu_custom_call.1} parent=0
    #allocation2 [shape = 'u8[8192]{0}', space=vmem, size = 0x2000, scoped, tag = 'input window, operand 0']
    #allocation3 [shape = 's32[2]{0}', space=sflag, size = 0x8, scoped, tag = 'scoped memory for tpu_custom_call.1']
    #allocation4 [shape = 's32[2]{0}', space=sflag, size = 0x8, scoped, tag = 'scoped memory for tpu_custom_call.1']
    #allocation5 [shape = 'u8[8192]{0}', space=vmem, size = 0x2000, scoped, tag = 'input window, operand 1, single buffered']
    #allocation6 [shape = 's32[1]{0}', space=sflag, size = 0x4, scoped, tag = 'scoped memory for tpu_custom_call.1']
    #allocation7 [shape = 'u8[8192]{0}', space=vmem, size = 0x2000, scoped, tag = 'input window, operand 3, single buffered']
    #allocation8 [shape = 'u8[8192]{0}', space=vmem, size = 0x2000, scoped, tag = 'output window, operand 0']
    %12 = vsyncpa [#allocation3], 0
    %s13 = scalar_lea.sflag [#allocation3], 1
    %14 = vsyncpa %s13, 0
    %15 = vsyncpa [#allocation6], 0
    %16 = vsyncpa [#allocation4], 0
    %s17 = scalar_lea.sflag [#allocation4], 1
    %18 = vsyncpa %s17, 0
    loop: start=0, step=1, limit=4
    $region2: #{tpu_custom_call.1} parent=1 // loop_pre_header
      _
    $region3: #{tpu_custom_call.1} parent=1 // loop_header
      %s20 = sphi 0, %s24
      %p21 = scmp.ge.s32.totalorder %s20, 4
      %s30 = sphi 0, %s32
      %s33 = sphi 0, %s30
      %s34 = sphi 0, %s33
      %s50 = sphi 0, %s34
      %s54 = sphi 0, %s54
      %s56 = sphi 0, %s54
      %s57 = sphi 0, %s56
      %s71 = sphi 0, %s57
      %s75 = sphi 0, %s75
      %s77 = sphi 0, %s75
      %s78 = sphi 0, %s77
      %s92 = sphi 0, %s78
      %s96 = sphi 0, %s96
      %s98 = sphi 0, %s96
      %s99 = sphi 0, %s98
      %s113 = sphi 0, %s99
      %s117 = sphi 0, %s117
      %s119 = sphi 0, %s117
      %s120 = sphi 0, %s119
      %s134 = sphi 0, %s120
      %s138 = sphi 0, %s138
      %s140 = sphi 0, %s138
      %s141 = sphi 0, %s140
      %s155 = sphi 0, %s141
      %s159 = sphi 0, %s159
      %s161 = sphi 0, %s159
      %s162 = sphi 0, %s161
      %s176 = sphi 0, %s162
      %s182 = sphi 0, %s184
      %s185 = sphi 0, %s182
      %s186 = sphi 0, %s185
      %s202 = sphi 0, %s186
    $region4: #{tpu_custom_call.1} parent=1 // loop_header_branch
      %23 = sbr.rel (%p21) target = $region8
    $region5: #{tpu_custom_call.1} parent=1 // loop_body
      %s25 = ssub.s32 %s20, 1
      %s26 = ssub.s32 %s20, 2
      %s27 = sadd.s32 %s20, 1
      %s28 = ssub.s32 %s20, %s27
      %p29 = scmp.eq.s32.totalorder %s28, 0
      %s31 = sadd.s32 %s30, 1
      %s32 = scalar_select %p29, %s30, %s31
      %p35 = pneg %p29
      %p36 = scmp.eq.s32.totalorder %s20, 1
      %p37 = por %p35, %p36
      %p38 = scmp.ne.s32.totalorder %s30, %s33
      %p39 = scmp.eq.s32.totalorder %s20, 0
      %p40 = por %p38, %p39
      %p41 = scmp.ne.s32.totalorder %s30, %s33
      %p42 = scmp.eq.s32.totalorder %s25, 1
      %p43 = por %p41, %p42
      %p44 = scmp.ne.s32.totalorder %s33, %s34
      %p45 = scmp.eq.s32.totalorder %s25, 0
      %p46 = por %p44, %p45
      %p47 = scmp.ne.s32.totalorder %s33, %s34
      %p48 = scmp.eq.s32.totalorder %s26, 1
      %p49 = por %p47, %p48
      %p51 = scmp.ne.s32.totalorder %s34, %s50
      %p52 = scmp.eq.s32.totalorder %s26, 0
      %p53 = por %p51, %p52
      %s55 = sadd.s32 %s54, 1
      %p58 = scmp.eq.s32.totalorder %s20, 1
      %p59 = scmp.ne.s32.totalorder %s54, %s56
      %p60 = scmp.eq.s32.totalorder %s20, 0
      %p61 = por %p59, %p60
      %p62 = scmp.ne.s32.totalorder %s54, %s56
      %p63 = scmp.eq.s32.totalorder %s25, 1
      %p64 = por %p62, %p63
      %p65 = scmp.ne.s32.totalorder %s56, %s57
      %p66 = scmp.eq.s32.totalorder %s25, 0
      %p67 = por %p65, %p66
      %p68 = scmp.ne.s32.totalorder %s56, %s57
      %p69 = scmp.eq.s32.totalorder %s26, 1
      %p70 = por %p68, %p69
      %p72 = scmp.ne.s32.totalorder %s57, %s71
      %p73 = scmp.eq.s32.totalorder %s26, 0
      %p74 = por %p72, %p73
      %s76 = sadd.s32 %s75, 1
      %p79 = scmp.eq.s32.totalorder %s20, 1
      %p80 = scmp.ne.s32.totalorder %s75, %s77
      %p81 = scmp.eq.s32.totalorder %s20, 0
      %p82 = por %p80, %p81
      %p83 = scmp.ne.s32.totalorder %s75, %s77
      %p84 = scmp.eq.s32.totalorder %s25, 1
      %p85 = por %p83, %p84
      %p86 = scmp.ne.s32.totalorder %s77, %s78
      %p87 = scmp.eq.s32.totalorder %s25, 0
      %p88 = por %p86, %p87
      %p89 = scmp.ne.s32.totalorder %s77, %s78
      %p90 = scmp.eq.s32.totalorder %s26, 1
      %p91 = por %p89, %p90
      %p93 = scmp.ne.s32.totalorder %s78, %s92
      %p94 = scmp.eq.s32.totalorder %s26, 0
      %p95 = por %p93, %p94
      %s97 = sadd.s32 %s96, 1
      %p100 = scmp.eq.s32.totalorder %s20, 1
      %p101 = scmp.ne.s32.totalorder %s96, %s98
      %p102 = scmp.eq.s32.totalorder %s20, 0
      %p103 = por %p101, %p102
      %p104 = scmp.ne.s32.totalorder %s96, %s98
      %p105 = scmp.eq.s32.totalorder %s25, 1
      %p106 = por %p104, %p105
      %p107 = scmp.ne.s32.totalorder %s98, %s99
      %p108 = scmp.eq.s32.totalorder %s25, 0
      %p109 = por %p107, %p108
      %p110 = scmp.ne.s32.totalorder %s98, %s99
      %p111 = scmp.eq.s32.totalorder %s26, 1
      %p112 = por %p110, %p111
      %p114 = scmp.ne.s32.totalorder %s99, %s113
      %p115 = scmp.eq.s32.totalorder %s26, 0
      %p116 = por %p114, %p115
      %s118 = sadd.s32 %s117, 1
      %p121 = scmp.eq.s32.totalorder %s20, 1
      %p122 = scmp.ne.s32.totalorder %s117, %s119
      %p123 = scmp.eq.s32.totalorder %s20, 0
      %p124 = por %p122, %p123
      %p125 = scmp.ne.s32.totalorder %s117, %s119
      %p126 = scmp.eq.s32.totalorder %s25, 1
      %p127 = por %p125, %p126
      %p128 = scmp.ne.s32.totalorder %s119, %s120
      %p129 = scmp.eq.s32.totalorder %s25, 0
      %p130 = por %p128, %p129
      %p131 = scmp.ne.s32.totalorder %s119, %s120
      %p132 = scmp.eq.s32.totalorder %s26, 1
      %p133 = por %p131, %p132
      %p135 = scmp.ne.s32.totalorder %s120, %s134
      %p136 = scmp.eq.s32.totalorder %s26, 0
      %p137 = por %p135, %p136
      %s139 = sadd.s32 %s138, 1
      %p142 = scmp.eq.s32.totalorder %s20, 1
      %p143 = scmp.ne.s32.totalorder %s138, %s140
      %p144 = scmp.eq.s32.totalorder %s20, 0
      %p145 = por %p143, %p144
      %p146 = scmp.ne.s32.totalorder %s138, %s140
      %p147 = scmp.eq.s32.totalorder %s25, 1
      %p148 = por %p146, %p147
      %p149 = scmp.ne.s32.totalorder %s140, %s141
      %p150 = scmp.eq.s32.totalorder %s25, 0
      %p151 = por %p149, %p150
      %p152 = scmp.ne.s32.totalorder %s140, %s141
      %p153 = scmp.eq.s32.totalorder %s26, 1
      %p154 = por %p152, %p153
      %p156 = scmp.ne.s32.totalorder %s141, %s155
      %p157 = scmp.eq.s32.totalorder %s26, 0
      %p158 = por %p156, %p157
      %s160 = sadd.s32 %s159, 1
      %p163 = scmp.eq.s32.totalorder %s20, 1
      %p164 = scmp.ne.s32.totalorder %s159, %s161
      %p165 = scmp.eq.s32.totalorder %s20, 0
      %p166 = por %p164, %p165
      %p167 = scmp.ne.s32.totalorder %s159, %s161
      %p168 = scmp.eq.s32.totalorder %s25, 1
      %p169 = por %p167, %p168
      %p170 = scmp.ne.s32.totalorder %s161, %s162
      %p171 = scmp.eq.s32.totalorder %s25, 0
      %p172 = por %p170, %p171
      %p173 = scmp.ne.s32.totalorder %s161, %s162
      %p174 = scmp.eq.s32.totalorder %s26, 1
      %p175 = por %p173, %p174
      %p177 = scmp.ne.s32.totalorder %s162, %s176
      %p178 = scmp.eq.s32.totalorder %s26, 0
      %p179 = por %p177, %p178
      %s180 = ssub.s32 %s20, %s27
      %p181 = scmp.eq.s32.totalorder %s180, 0
      %s183 = sadd.s32 %s182, 1
      %s184 = scalar_select %p181, %s182, %s183
      %p187 = pneg %p181
      %p188 = scmp.eq.s32.totalorder %s20, 1
      %p189 = por %p187, %p188
      %p190 = scmp.ne.s32.totalorder %s182, %s185
      %p191 = scmp.eq.s32.totalorder %s20, 0
      %p192 = por %p190, %p191
      %p193 = scmp.ne.s32.totalorder %s182, %s185
      %p194 = scmp.eq.s32.totalorder %s25, 1
      %p195 = por %p193, %p194
      %p196 = scmp.ne.s32.totalorder %s185, %s186
      %p197 = scmp.eq.s32.totalorder %s25, 0
      %p198 = por %p196, %p197
      %p199 = scmp.ne.s32.totalorder %s185, %s186
      %p200 = scmp.eq.s32.totalorder %s26, 1
      %p201 = por %p199, %p200
      %p203 = scmp.ne.s32.totalorder %s186, %s202
      %p204 = scmp.eq.s32.totalorder %s26, 0
      %p205 = por %p203, %p204
      %p206 = scmp.le.s32.totalorder 1, %s20
      %p207 = scmp.lt.s32.totalorder %s20, 3
      %p208 = pnand %p206, %p207
      %p209 = pneg %p208
      // Predicated region
      $region9: #{tpu_custom_call.1} parent=5 // pred_check
        _
      $region10: #{tpu_custom_call.1} parent=5 // pred_check_branch
        %211 = sbr.rel (%p208) target = $region12
      $region11: #{tpu_custom_call.1} parent=5 // pred_region
        %s212 = ssub.s32 %s20, 1
        // Predicated region
        $region13: #{tpu_custom_call.1} parent=11 // pred_check
          %p213 = pneg %p67
        $region14: #{tpu_custom_call.1} parent=11 // pred_check_branch
          %215 = sbr.rel (%p213) target = $region16
        $region15: #{tpu_custom_call.1} parent=11 // pred_region
          %s217 = ssub.s32 256, 256
          %218 = vsyncadd [#allocation6], %s217
          %s219 = sshll.u32 [#allocation5], 4
          %s220 = int_to_ptr.vmem [resolvable:$true] %s219
          %225 = dma.hbm_to_vmem [thread:$0]  %s1, 256, %s220, [#allocation6], 64, 64, 4
        $region16: #{tpu_custom_call.1} parent=11 // pred_fallthru
          _
        // Predicated region
        $region17: #{tpu_custom_call.1} parent=11 // pred_check
          %p226 = pneg %p88
        $region18: #{tpu_custom_call.1} parent=11 // pred_check_branch
          %228 = sbr.rel (%p226) target = $region20
        $region19: #{tpu_custom_call.1} parent=11 // pred_region
          _
        $region20: #{tpu_custom_call.1} parent=11 // pred_fallthru
          _
        // Predicated region
        $region21: #{tpu_custom_call.1} parent=11 // pred_check
          %p229 = pneg %p109
        $region22: #{tpu_custom_call.1} parent=11 // pred_check_branch
          %231 = sbr.rel (%p229) target = $region24
        $region23: #{tpu_custom_call.1} parent=11 // pred_region
          %s233 = ssub.s32 256, 256
          %234 = vsyncadd [#allocation6], %s233
          %s235 = sshll.u32 [#allocation7], 4
          %s236 = int_to_ptr.vmem [resolvable:$true] %s235
          %241 = dma.hbm_to_vmem [thread:$0]  %s3, 256, %s236, [#allocation6], 64, 64, 4
        $region24: #{tpu_custom_call.1} parent=11 // pred_fallthru
          _
        // Predicated region
        $region25: #{tpu_custom_call.1} parent=11 // pred_check
          %p242 = pneg %p130
        $region26: #{tpu_custom_call.1} parent=11 // pred_check_branch
          %244 = sbr.rel (%p242) target = $region28
        $region27: #{tpu_custom_call.1} parent=11 // pred_region
          _
        $region28: #{tpu_custom_call.1} parent=11 // pred_fallthru
          _
        // Predicated region
        $region29: #{tpu_custom_call.1} parent=11 // pred_check
          %p245 = pneg %p151
        $region30: #{tpu_custom_call.1} parent=11 // pred_check_branch
          %247 = sbr.rel (%p245) target = $region32
        $region31: #{tpu_custom_call.1} parent=11 // pred_region
          _
        $region32: #{tpu_custom_call.1} parent=11 // pred_fallthru
          _
        // Predicated region
        $region33: #{tpu_custom_call.1} parent=11 // pred_check
          %p248 = pneg %p172
        $region34: #{tpu_custom_call.1} parent=11 // pred_check_branch
          %250 = sbr.rel (%p248) target = $region36
        $region35: #{tpu_custom_call.1} parent=11 // pred_region
          _
        $region36: #{tpu_custom_call.1} parent=11 // pred_fallthru
          _
      $region12: #{tpu_custom_call.1} parent=5 // pred_fallthru
        _
      %p251 = scmp.lt.s32.totalorder %s20, 2
      // Predicated region
      $region37: #{tpu_custom_call.1} parent=5 // pred_check
        %p252 = pneg %p251
      $region38: #{tpu_custom_call.1} parent=5 // pred_check_branch
        %254 = sbr.rel (%p252) target = $region40
      $region39: #{tpu_custom_call.1} parent=5 // pred_region
        // Predicated region
        $region41: #{tpu_custom_call.1} parent=39 // pred_check
          %p255 = pneg %p40
        $region42: #{tpu_custom_call.1} parent=39 // pred_check_branch
          %257 = sbr.rel (%p255) target = $region44
        $region43: #{tpu_custom_call.1} parent=39 // pred_region
          %s258 = sand.u32 %s30, 1
          %s259 = scalar_lea.sflag [#allocation3], %s258
          %s260 = sand.u32 %s30, 1
          %s261 = smul.addr %s260, 8
          %s262 = scalar_lea.vmem [#allocation2], %s261
          %s264 = ssub.s32 128, 128
          %265 = vsyncadd %s259, %s264
          %s266 = smul.addr %s20, 128
          %s267 = scalar_lea.hbm %s0, %s266
          %s269 = sshll.u32 %s262, 4
          %s270 = int_to_ptr.vmem [resolvable:$true] %s269
          %272 = dma.hbm_to_vmem [thread:$0]  %s267, 128, %s270, %s259
        $region44: #{tpu_custom_call.1} parent=39 // pred_fallthru
          _
      $region40: #{tpu_custom_call.1} parent=5 // pred_fallthru
        _
      %p273 = scmp.le.s32.totalorder 1, %s20
      %p274 = scmp.lt.s32.totalorder %s20, 3
      %p275 = pnand %p273, %p274
      %p276 = pneg %p275
      // Predicated region
      $region45: #{tpu_custom_call.1} parent=5 // pred_check
        _
      $region46: #{tpu_custom_call.1} parent=5 // pred_check_branch
        %278 = sbr.rel (%p275) target = $region48
      $region47: #{tpu_custom_call.1} parent=5 // pred_region
        %s279 = ssub.s32 %s20, 1
        %s280 = sand.u32 %s33, 1
        %s281 = scalar_lea.sflag [#allocation3], %s280
        %s282 = sand.u32 %s33, 1
        %s283 = smul.addr %s282, 8
        %s284 = scalar_lea.vmem [#allocation2], %s283
        // Predicated region
        $region49: #{tpu_custom_call.1} parent=47 // pred_check
          %p285 = pneg %p46
        $region50: #{tpu_custom_call.1} parent=47 // pred_check_branch
          %287 = sbr.rel (%p285) target = $region52
        $region51: #{tpu_custom_call.1} parent=47 // pred_region
          %288 = dma.done %s281, 128
        $region52: #{tpu_custom_call.1} parent=47 // pred_fallthru
          _
        // Predicated region
        $region53: #{tpu_custom_call.1} parent=47 // pred_check
          %p289 = pneg %p67
        $region54: #{tpu_custom_call.1} parent=47 // pred_check_branch
          %291 = sbr.rel (%p289) target = $region56
        $region55: #{tpu_custom_call.1} parent=47 // pred_region
          %292 = dma.done [#allocation6], 256
        $region56: #{tpu_custom_call.1} parent=47 // pred_fallthru
          _
        // Predicated region
        $region57: #{tpu_custom_call.1} parent=47 // pred_check
          %p293 = pneg %p109
        $region58: #{tpu_custom_call.1} parent=47 // pred_check_branch
          %295 = sbr.rel (%p293) target = $region60
        $region59: #{tpu_custom_call.1} parent=47 // pred_region
          %296 = dma.done [#allocation6], 256
        $region60: #{tpu_custom_call.1} parent=47 // pred_fallthru
          _
        %s297 = sand.u32 %s33, 1
        %s298 = scalar_lea.sflag [#allocation3], %s297
        %s299 = sand.u32 %s33, 1
        %s300 = smul.addr %s299, 8
        %s301 = scalar_lea.vmem [#allocation2], %s300
        %p302 = pneg %p46
        %p303 = pneg %p43
        %p304 = pneg %p67
        %p305 = pneg %p64
        %p306 = pneg %p88
        %p307 = pneg %p85
        %p308 = pneg %p109
        %p309 = pneg %p106
        %p310 = pneg %p130
        %p311 = pneg %p127
        %p312 = pneg %p151
        %p313 = pneg %p148
        %p314 = pneg %p172
        %p315 = pneg %p169
        %p316 = pneg %p198
        %p317 = pneg %p195
        %s318 = sand.u32 %s185, 1
        %s319 = scalar_lea.sflag [#allocation4], %s318
        %s320 = sand.u32 %s185, 1
        %s321 = smul.addr %s320, 8
        %s322 = scalar_lea.vmem [#allocation8], %s321
        %v324 = vld [vmem:[%s284] sm:$0xff]
        %v325 = vpack.c.bf16 %v324, %v324
        %v326 = vld [vmem:[#allocation5] sm:$0xf]
        %v327 = vld [vmem:[#allocation5 + $0x4] sm:$0xf]
        %v328 = vld [vmem:[#allocation5 + $0x8] sm:$0xf]
        %v329 = vld [vmem:[#allocation5 + $0xc] sm:$0xf]
        %v330 = vld [vmem:[%s2] sm:$0x1]
        %v332 = vlaneseq
        %v333 = vshrl.u32 %v332, 7
        %v334 = vsub.s32 0, %v333
        %v335 = vrot.slane %v330, %v334
        %v341 = vunpack.c.l.b16 %v326
        %v342 = vunpack.c.l.b16 %v327
        %v343 = vunpack.c.l.b16 %v328
        %v344 = vunpack.c.l.b16 %v329
        %v345 = vpack.c.b16 %v342, %v341
        %v346 = vpack.c.b16 %v344, %v343
        %vm349 = vcmask 261120
        %v351 = vsel %vm349, %v325, 0
        %353 = vmatprep.subr.bf16.mxu0 0
        %354 = vmatpush1.bf16.msra.mxu0 %v345
        %355 = vmatprep.subr.bf16.mxu0 0
        %356 = vmatpush1.bf16.msra.mxu0 %v346
        %357 = vmatprep.subr.bf16.mxu0 0
        %358 = vmatpush1.bf16.msra.mxu0 0
        %359 = vmatprep.subr.bf16.mxu0 0
        %360 = vmatpush1.bf16.msra.mxu0 0
        %361 = vmatprep.subr.bf16.mxu0 0
        %362 = vmatpush1.bf16.msra.mxu0 0
        %363 = vmatprep.subr.bf16.mxu0 0
        %364 = vmatpush1.bf16.msra.mxu0 0
        %365 = vmatprep.subr.bf16.mxu0 0
        %366 = vmatpush1.bf16.msra.mxu0 0
        %367 = vmatprep.subr.bf16.mxu0 0
        %368 = vmatpush1.bf16.msra.mxu0 0
        %369 = vmatprep.subr.bf16.mxu0 0
        %370 = vmatpush1.bf16.msra.mxu0 0
        %371 = vmatprep.subr.bf16.mxu0 0
        %372 = vmatpush1.bf16.msra.mxu0 0
        %373 = vmatprep.subr.bf16.mxu0 0
        %374 = vmatpush1.bf16.msra.mxu0 0
        %375 = vmatprep.subr.bf16.mxu0 0
        %376 = vmatpush1.bf16.msra.mxu0 0
        %377 = vmatprep.subr.bf16.mxu0 0
        %378 = vmatpush1.bf16.msra.mxu0 0
        %379 = vmatprep.subr.bf16.mxu0 0
        %380 = vmatpush1.bf16.msra.mxu0 0
        %381 = vmatprep.subr.bf16.mxu0 0
        %382 = vmatpush1.bf16.msra.mxu0 0
        %383 = vmatprep.subr.bf16.mxu0 0
        %384 = vmatpush1.bf16.msra.mxu0 0
        %385 = vmatprep.mubr.bf16.mxu0 0
        %386 = vmatmul.mubr.bf16.gmra.mrb[0].mxu0 %v351
        %v387 = vpop.f32.mrb[0].mxu0
        %v388 = vadd.f32 %v335, %v387
        %v389 = vpop.f32.mrb[0].mxu0
        %v390 = vpop.f32.mrb[0].mxu0
        %v391 = vpop.f32.mrb[0].mxu0
        %392 = vdwg.mxu0
        %v393 = vmax.f32 %v388, 0.0
        %v394 = vpack.c.bf16 %v393, %v393
        %v395 = vld [vmem:[#allocation7] sm:$0xf]
        %v396 = vld [vmem:[#allocation7 + $0x4] sm:$0xf]
        %v397 = vld [vmem:[#allocation7 + $0x8] sm:$0xf]
        %v398 = vld [vmem:[#allocation7 + $0xc] sm:$0xf]
        %v399 = vld [vmem:[%s4] sm:$0x1]
        %v401 = vlaneseq
        %v402 = vshrl.u32 %v401, 7
        %v403 = vsub.s32 0, %v402
        %v404 = vrot.slane %v399, %v403
        %v410 = vunpack.c.l.b16 %v395
        %v411 = vunpack.c.l.b16 %v396
        %v412 = vunpack.c.l.b16 %v397
        %v413 = vunpack.c.l.b16 %v398
        %v414 = vpack.c.b16 %v411, %v410
        %v415 = vpack.c.b16 %v413, %v412
        %v419 = vsel %vm349, %v394, 0
        %421 = vmatprep.subr.bf16.mxu0 0
        %422 = vmatpush1.bf16.msra.mxu0 %v414
        %423 = vmatprep.subr.bf16.mxu0 0
        %424 = vmatpush1.bf16.msra.mxu0 %v415
        %425 = vmatprep.subr.bf16.mxu0 0
        %426 = vmatpush1.bf16.msra.mxu0 0
        %427 = vmatprep.subr.bf16.mxu0 0
        %428 = vmatpush1.bf16.msra.mxu0 0
        %429 = vmatprep.subr.bf16.mxu0 0
        %430 = vmatpush1.bf16.msra.mxu0 0
        %431 = vmatprep.subr.bf16.mxu0 0
        %432 = vmatpush1.bf16.msra.mxu0 0
        %433 = vmatprep.subr.bf16.mxu0 0
        %434 = vmatpush1.bf16.msra.mxu0 0
        %435 = vmatprep.subr.bf16.mxu0 0
        %436 = vmatpush1.bf16.msra.mxu0 0
        %437 = vmatprep.subr.bf16.mxu0 0
        %438 = vmatpush1.bf16.msra.mxu0 0
        %439 = vmatprep.subr.bf16.mxu0 0
        %440 = vmatpush1.bf16.msra.mxu0 0
        %441 = vmatprep.subr.bf16.mxu0 0
        %442 = vmatpush1.bf16.msra.mxu0 0
        %443 = vmatprep.subr.bf16.mxu0 0
        %444 = vmatpush1.bf16.msra.mxu0 0
        %445 = vmatprep.subr.bf16.mxu0 0
        %446 = vmatpush1.bf16.msra.mxu0 0
        %447 = vmatprep.subr.bf16.mxu0 0
        %448 = vmatpush1.bf16.msra.mxu0 0
        %449 = vmatprep.subr.bf16.mxu0 0
        %450 = vmatpush1.bf16.msra.mxu0 0
        %451 = vmatprep.subr.bf16.mxu0 0
        %452 = vmatpush1.bf16.msra.mxu0 0
        %453 = vmatprep.mubr.bf16.mxu0 0
        %454 = vmatmul.mubr.bf16.gmra.mrb[0].mxu0 %v419
        %v455 = vpop.f32.mrb[0].mxu0
        %v456 = vadd.f32 %v404, %v455
        %v457 = vpop.f32.mrb[0].mxu0
        %v458 = vpop.f32.mrb[0].mxu0
        %v459 = vpop.f32.mrb[0].mxu0
        %460 = vdwg.mxu0
        %v461 = vmax.f32 %v456, 0.0
        %v462 = vpack.c.bf16 %v461, %v461
        %v463 = vld [vmem:[%s5] sm:$0xf]
        %v464 = vld [vmem:[%s5 + $0x4] sm:$0xf]
        %v465 = vld [vmem:[%s5 + $0x8] sm:$0xf]
        %v466 = vld [vmem:[%s5 + $0xc] sm:$0xf]
        %v467 = vld [vmem:[%s6] sm:$0x1]
        %v469 = vlaneseq
        %v470 = vshrl.u32 %v469, 7
        %v471 = vsub.s32 0, %v470
        %v472 = vrot.slane %v467, %v471
        %v478 = vunpack.c.l.b16 %v463
        %v479 = vunpack.c.l.b16 %v464
        %v480 = vunpack.c.l.b16 %v465
        %v481 = vunpack.c.l.b16 %v466
        %v482 = vpack.c.b16 %v479, %v478
        %v483 = vpack.c.b16 %v481, %v480
        %v487 = vsel %vm349, %v462, 0
        %489 = vmatprep.subr.bf16.mxu0 0
        %490 = vmatpush1.bf16.msra.mxu0 %v482
        %491 = vmatprep.subr.bf16.mxu0 0
        %492 = vmatpush1.bf16.msra.mxu0 %v483
        %493 = vmatprep.subr.bf16.mxu0 0
        %494 = vmatpush1.bf16.msra.mxu0 0
        %495 = vmatprep.subr.bf16.mxu0 0
        %496 = vmatpush1.bf16.msra.mxu0 0
        %497 = vmatprep.subr.bf16.mxu0 0
        %498 = vmatpush1.bf16.msra.mxu0 0
        %499 = vmatprep.subr.bf16.mxu0 0
        %500 = vmatpush1.bf16.msra.mxu0 0
        %501 = vmatprep.subr.bf16.mxu0 0
        %502 = vmatpush1.bf16.msra.mxu0 0
        %503 = vmatprep.subr.bf16.mxu0 0
        %504 = vmatpush1.bf16.msra.mxu0 0
        %505 = vmatprep.subr.bf16.mxu0 0
        %506 = vmatpush1.bf16.msra.mxu0 0
        %507 = vmatprep.subr.bf16.mxu0 0
        %508 = vmatpush1.bf16.msra.mxu0 0
        %509 = vmatprep.subr.bf16.mxu0 0
        %510 = vmatpush1.bf16.msra.mxu0 0
        %511 = vmatprep.subr.bf16.mxu0 0
        %512 = vmatpush1.bf16.msra.mxu0 0
        %513 = vmatprep.subr.bf16.mxu0 0
        %514 = vmatpush1.bf16.msra.mxu0 0
        %515 = vmatprep.subr.bf16.mxu0 0
        %516 = vmatpush1.bf16.msra.mxu0 0
        %517 = vmatprep.subr.bf16.mxu0 0
        %518 = vmatpush1.bf16.msra.mxu0 0
        %519 = vmatprep.subr.bf16.mxu0 0
        %520 = vmatpush1.bf16.msra.mxu0 0
        %521 = vmatprep.mubr.bf16.mxu0 0
        %522 = vmatmul.mubr.bf16.gmra.mrb[0].mxu0 %v487
        %v523 = vpop.f32.mrb[0].mxu0
        %v524 = vadd.f32 %v472, %v523
        %v525 = vpop.f32.mrb[0].mxu0
        %v526 = vpop.f32.mrb[0].mxu0
        %v527 = vpop.f32.mrb[0].mxu0
        %528 = vdwg.mxu0
        %v529 = vxor.u32 %v524, 2147483648
        %v530 = vmul.f32 %v529, 1.442695
        %v531 = vpow.pop %v530
        %v532 = vadd.f32 %v531, 1.0
        %v533 = vrcp.pop %v532
        %v534 = vmul.f32 1.0, %v533
        %535 = vst [vmem:[%s322] sm:$0xff] %v534
        %s536 = sand.u32 %s185, 1
        %s537 = scalar_lea.sflag [#allocation4], %s536
        %s538 = sand.u32 %s185, 1
        %s539 = smul.addr %s538, 8
        %s540 = scalar_lea.vmem [#allocation8], %s539
        // Predicated region
        $region61: #{tpu_custom_call.1} parent=47 // pred_check
          %p541 = pneg %p195
        $region62: #{tpu_custom_call.1} parent=47 // pred_check_branch
          %543 = sbr.rel (%p541) target = $region64
        $region63: #{tpu_custom_call.1} parent=47 // pred_region
          %s545 = ssub.s32 128, 128
          %546 = vsyncadd %s537, %s545
          %s547 = smul.addr %s25, 128
          %s548 = scalar_lea.hbm %s7, %s547
          %s550 = sshll.u32 %s540, 4
          %s551 = int_to_ptr.vmem [resolvable:$true] %s550
          %553 = dma.vmem_to_hbm [thread:$0]  %s551, 128, %s548, %s537
        $region64: #{tpu_custom_call.1} parent=47 // pred_fallthru
          _
      $region48: #{tpu_custom_call.1} parent=5 // pred_fallthru
        _
      %p554 = scmp.le.s32.totalorder 2, %s20
      // Predicated region
      $region65: #{tpu_custom_call.1} parent=5 // pred_check
        %p555 = pneg %p554
      $region66: #{tpu_custom_call.1} parent=5 // pred_check_branch
        %557 = sbr.rel (%p555) target = $region68
      $region67: #{tpu_custom_call.1} parent=5 // pred_region
        %s558 = ssub.s32 %s20, 2
        // Predicated region
        $region69: #{tpu_custom_call.1} parent=67 // pred_check
          %p559 = pneg %p201
        $region70: #{tpu_custom_call.1} parent=67 // pred_check_branch
          %561 = sbr.rel (%p559) target = $region72
        $region71: #{tpu_custom_call.1} parent=67 // pred_region
          %s562 = sand.u32 %s186, 1
          %s563 = scalar_lea.sflag [#allocation4], %s562
          %s564 = sand.u32 %s186, 1
          %s565 = smul.addr %s564, 8
          %s566 = scalar_lea.vmem [#allocation8], %s565
          %567 = dma.done %s563, 128
        $region72: #{tpu_custom_call.1} parent=67 // pred_fallthru
          _
      $region68: #{tpu_custom_call.1} parent=5 // pred_fallthru
        _
    $region6: #{tpu_custom_call.1} parent=1 // loop_footer
      %s24 = sadd.s32 1, %s20
    $region7: #{tpu_custom_call.1} parent=1 // loop_footer_branch
      %19 = sbr.rel target = $region3
    $region8: #{tpu_custom_call.1} parent=1 // loop_exit
      _
    %568 = vsyncpa [#allocation3], 1
    %s569 = scalar_lea.sflag [#allocation3], 1
    %570 = vsyncpa %s569, 1
    %571 = vsyncpa [#allocation6], 1
    %572 = vsyncpa [#allocation4], 1
    %s573 = scalar_lea.sflag [#allocation4], 1
    %574 = vsyncpa %s573, 1

</llo_original>
